<compile_context>
chip_gen: v7x
topology: tpu7x:2x2x1
jax: 0.10.0
libtpu: 0.0.40
codegen_flags: <defaults>
</compile_context>

<pallas_src>
import jax
import jax.numpy as jnp
from jax import lax
from jax.experimental import pallas as pl
from jax.experimental.pallas import tpu as pltpu

GAMMA = 2.0
LABEL_SMOOTHING = 0.1


def _round_up(x, m):
    return ((x + m - 1) // m) * m


def _focal_loss_kernel(x_ref, t_ref, out_ref):
    # x_ref: (TILE_N, C) logits, t_ref: (TILE_N, 1) int32 targets,
    # out_ref: (TILE_N, 1) f32 per-row focal losses.
    x = x_ref[...].astype(jnp.float32)            # (TILE_N, C)
    t = t_ref[...]                                # (TILE_N, 1) int32
    tn, c = x.shape

    # one-hot mask via iota compare (scatter/gather equivalent)
    class_ids = lax.broadcasted_iota(jnp.int32, (tn, c), 1)
    one_hot = class_ids == t                      # (TILE_N, C) bool

    # numerically-stable log-softmax pieces (single (TILE_N,C) exp pass)
    m = jnp.max(x, axis=-1, keepdims=True)
    z = x - m
    lse = jnp.log(jnp.sum(jnp.exp(z), axis=-1, keepdims=True))   # (TILE_N, 1)

    # logp at the target class and sum of logp over all classes
    z_t = jnp.sum(jnp.where(one_hot, z, jnp.float32(0.0)),
                  axis=-1, keepdims=True)                        # (TILE_N, 1)
    logp_t = z_t - lse                                           # (TILE_N, 1)
    sum_logp = jnp.sum(z, axis=-1, keepdims=True) - jnp.float32(c) * lse

    # label-smoothed cross entropy:
    #   smooth = off everywhere, on at target  ->  -(off*sum_logp + (on-off)*logp_t)
    off = jnp.float32(LABEL_SMOOTHING / (c - 1)) if c > 1 else jnp.float32(0.0)
    on = jnp.float32(1.0 - LABEL_SMOOTHING)
    loss = -(off * sum_logp + (on - off) * logp_t)               # (TILE_N, 1)

    # focal weight: pt = softmax(x)[target] = exp(logp_t); gamma = 2 -> w*w
    pt = jnp.exp(logp_t)
    w = jnp.maximum(jnp.float32(1.0) - pt, jnp.float32(0.0))
    focal_weight = w * w
    # alpha is None in the module defaults -> no alpha scaling.
    out_ref[...] = focal_weight * loss


def improved_focal_loss(inputs, targets, tile_n=512):
    """inputs: (N, C) float logits; targets: (N,) int class indices -> scalar f32."""
    n, c = inputs.shape

    # Tile sizing: multiple of 8 sublanes, capped so a (TILE_N, C) f32 working
    # copy stays <= ~4 MiB (safe for v5e's 16 MiB scoped VMEM with
    # double-buffering + temporaries; far under v6e/v7x budgets).
    bytes_per_row = max(c, 1) * 4
    max_rows = max(8, (4 * 1024 * 1024) // bytes_per_row)
    tile_n = min(tile_n, max_rows, _round_up(n, 8))
    tile_n = max(8, (tile_n // 8) * 8)

    n_pad = _round_up(n, tile_n)
    num_tiles = n_pad // tile_n

    x = inputs
    t = targets.astype(jnp.int32).reshape(n, 1)
    if n_pad != n:
        x = jnp.pad(x, ((0, n_pad - n), (0, 0)))
        t = jnp.pad(t, ((0, n_pad - n), (0, 0)))

    per_row = pl.pallas_call(
        _focal_loss_kernel,
        out_shape=jax.ShapeDtypeStruct((n_pad, 1), jnp.float32),
        grid=(num_tiles,),
        in_specs=[
            pl.BlockSpec((tile_n, c), lambda i: (i, 0)),
            pl.BlockSpec((tile_n, 1), lambda i: (i, 0)),
        ],
        out_specs=pl.BlockSpec((tile_n, 1), lambda i: (i, 0)),
        compiler_params=pltpu.CompilerParams(
            dimension_semantics=("parallel",)),
    )(x, t)

    # reduction='mean' over the real rows (padded rows sliced off here).
    return jnp.sum(per_row[:n, 0]) / jnp.float32(n)


def _reference(inputs, targets):
    n, c = inputs.shape
    one_hot = jax.nn.one_hot(targets, c, dtype=jnp.float32)
    smooth = one_hot * (1.0 - LABEL_SMOOTHING) + (1.0 - one_hot) * (LABEL_SMOOTHING / (c - 1))
    log_probs = jax.nn.log_softmax(inputs.astype(jnp.float32), axis=-1)
    loss = -jnp.sum(smooth * log_probs, axis=-1)
    probs = jax.nn.softmax(inputs.astype(jnp.float32), axis=-1)
    pt = jnp.sum(one_hot * probs, axis=-1)
    focal = ((1.0 - pt) ** GAMMA) * loss
    return jnp.mean(focal)


if __name__ == "__main__":
    key = jax.random.PRNGKey(0)
    k1, k2, k3, k4 = jax.random.split(key, 4)

    # small shapes consistent with the module: batch=8, num_classes=16
    N, C = 8, 16
    inputs = jax.random.normal(k1, (N, C), dtype=jnp.float32)
    targets = jax.random.randint(k2, (N,), 0, C, dtype=jnp.int32)
    out = improved_focal_loss(inputs, targets)
    jax.block_until_ready(out)
    ref = _reference(inputs, targets)
    assert jnp.allclose(out, ref, atol=1e-5, rtol=1e-5), (out, ref)

    # exercise the multi-tile grid + row-padding path
    N2, C2 = 40, 16
    inputs2 = jax.random.normal(k3, (N2, C2), dtype=jnp.float32)
    targets2 = jax.random.randint(k4, (N2,), 0, C2, dtype=jnp.int32)
    out2 = improved_focal_loss(inputs2, targets2, tile_n=16)
    jax.block_until_ready(out2)
    ref2 = _reference(inputs2, targets2)
    assert jnp.allclose(out2, ref2, atol=1e-5, rtol=1e-5), (out2, ref2)

    print("KERNEL_OK")
</pallas_src>

<mosaic_0001>
module attributes {stable_mosaic.version = 11 : i64} {
  func.func @_focal_loss_kernel(%arg0: i32, %arg1: memref<8x16xf32, #tpu.memory_space<vmem>>, %arg2: memref<8x1xi32, #tpu.memory_space<vmem>>, %arg3: memref<8x1xf32, #tpu.memory_space<vmem>>) attributes {dimension_semantics = [#tpu.dimension_semantics<parallel>], iteration_bounds = array<i64: 1>, scalar_prefetch = 0 : i64, scratch_operands = 0 : i64, tpu.core_type = #tpu.core_type<tc>, window_params = [{transform_indices = @transform_0, window_bounds = array<i64: 8, 16>}, {transform_indices = @transform_1, window_bounds = array<i64: 8, 1>}, {transform_indices = @transform_2, window_bounds = array<i64: 8, 1>}]} {
    %c0 = arith.constant 0 : index
    %c0_0 = arith.constant 0 : index
    %0 = vector.load %arg1[%c0, %c0_0] : memref<8x16xf32, #tpu.memory_space<vmem>>, vector<8x16xf32>
    %c0_1 = arith.constant 0 : index
    %c0_2 = arith.constant 0 : index
    %1 = vector.load %arg2[%c0_1, %c0_2] : memref<8x1xi32, #tpu.memory_space<vmem>>, vector<8x1xi32>
    %2 = tpu.iota {dimensions = array<i32: 1>} : vector<8x16xi32>
    %3 = vector.broadcast %1 : vector<8x1xi32> to vector<8x16xi32>
    %4 = arith.cmpi eq, %2, %3 : vector<8x16xi32>
    %cst = arith.constant dense<0xFF800000> : vector<8xf32>
    %5 = vector.multi_reduction <maximumf>, %0, %cst [1] : vector<8x16xf32> to vector<8xf32>
    %6 = vector.shape_cast %5 : vector<8xf32> to vector<8x1xf32>
    %7 = vector.broadcast %6 : vector<8x1xf32> to vector<8x16xf32>
    %8 = arith.subf %0, %7 : vector<8x16xf32>
    %9 = math.exp %8 : vector<8x16xf32>
    %cst_3 = arith.constant dense<0.000000e+00> : vector<8xf32>
    %10 = vector.multi_reduction <add>, %9, %cst_3 [1] : vector<8x16xf32> to vector<8xf32>
    %11 = vector.shape_cast %10 : vector<8xf32> to vector<8x1xf32>
    %12 = math.log %11 : vector<8x1xf32>
    %cst_4 = arith.constant 0.000000e+00 : f32
    %13 = vector.broadcast %cst_4 : f32 to vector<8x16xf32>
    %14 = arith.select %4, %8, %13 : vector<8x16xi1>, vector<8x16xf32>
    %cst_5 = arith.constant dense<0.000000e+00> : vector<8xf32>
    %15 = vector.multi_reduction <add>, %14, %cst_5 [1] : vector<8x16xf32> to vector<8xf32>
    %16 = vector.shape_cast %15 : vector<8xf32> to vector<8x1xf32>
    %17 = arith.subf %16, %12 : vector<8x1xf32>
    %cst_6 = arith.constant dense<0.000000e+00> : vector<8xf32>
    %18 = vector.multi_reduction <add>, %8, %cst_6 [1] : vector<8x16xf32> to vector<8xf32>
    %19 = vector.shape_cast %18 : vector<8xf32> to vector<8x1xf32>
    %cst_7 = arith.constant 1.600000e+01 : f32
    %20 = vector.broadcast %cst_7 : f32 to vector<8x1xf32>
    %21 = arith.mulf %20, %12 : vector<8x1xf32>
    %22 = arith.subf %19, %21 : vector<8x1xf32>
    %cst_8 = arith.constant 0.00666666683 : f32
    %23 = vector.broadcast %cst_8 : f32 to vector<8x1xf32>
    %24 = arith.mulf %23, %22 : vector<8x1xf32>
    %cst_9 = arith.constant 0.899999976 : f32
    %cst_10 = arith.constant 0.00666666683 : f32
    %25 = arith.subf %cst_9, %cst_10 : f32
    %26 = vector.broadcast %25 : f32 to vector<8x1xf32>
    %27 = arith.mulf %26, %17 : vector<8x1xf32>
    %28 = arith.addf %24, %27 : vector<8x1xf32>
    %cst_11 = arith.constant 0.000000e+00 : f32
    %29 = vector.broadcast %cst_11 : f32 to vector<8x1xf32>
    %30 = arith.subf %29, %28 : vector<8x1xf32>
    %31 = math.exp %17 : vector<8x1xf32>
    %cst_12 = arith.constant 1.000000e+00 : f32
    %32 = vector.broadcast %cst_12 : f32 to vector<8x1xf32>
    %33 = arith.subf %32, %31 : vector<8x1xf32>
    %cst_13 = arith.constant 0.000000e+00 : f32
    %34 = vector.broadcast %cst_13 : f32 to vector<8x1xf32>
    %35 = arith.maximumf %33, %34 : vector<8x1xf32>
    %36 = arith.mulf %35, %35 : vector<8x1xf32>
    %37 = arith.mulf %36, %30 : vector<8x1xf32>
    %c0_14 = arith.constant 0 : index
    %c0_15 = arith.constant 0 : index
    %38 = vector.load %arg3[%c0_14, %c0_15] : memref<8x1xf32, #tpu.memory_space<vmem>>, vector<8x1xf32>
    tpu.vector_store %arg3[%c0_14, %c0_15], %37 {strides = array<i32>} : memref<8x1xf32, #tpu.memory_space<vmem>>, vector<8x1xf32>,
    return
  }
  func.func @transform_0(%arg0: i32) -> (i32, i32) {
    %c0_i32 = arith.constant 0 : i32
    %c0_i32_0 = arith.constant 0 : i32
    return %arg0, %c0_i32 : i32, i32
  }
  func.func @transform_1(%arg0: i32) -> (i32, i32) {
    %c0_i32 = arith.constant 0 : i32
    %c0_i32_0 = arith.constant 0 : i32
    return %arg0, %c0_i32 : i32, i32
  }
  func.func @transform_2(%arg0: i32) -> (i32, i32) {
    %c0_i32 = arith.constant 0 : i32
    %c0_i32_0 = arith.constant 0 : i32
    return %arg0, %c0_i32 : i32, i32
  }
}

</mosaic_0001>

<llo_original>
// kernel: tpu_custom_call.1
$region0: #{tpu_custom_call.1}
  #allocation0 [shape = 'u32[]', space=smem, size = 0x4, offset = 0x4, fixed_abs, tag = 'smem constant byte address 0x4 - core index']
  #allocation1 [shape = 'u32[144,128]{1,0:T(1,128)}', space=vmem, size = 0x12000, scoped, tag = 'internal scratch']
  %s0 = inlined_call_operand.vmem [shape: f32[8,16], index: 0, kind: input, shape index: {}]
  %s1 = inlined_call_operand.vmem [shape: s32[8,1], index: 1, kind: input, shape index: {}]
  %s2 = inlined_call_operand.vmem [shape: f32[8,1], index: 2, kind: output, shape index: {}]
  %s3 = sld [smem:[#allocation0]]
  $region18: #{tpu_custom_call.1} parent=0
    _
  %s5 = ssub.s32 1, %s3
  %s6 = scalar_select 0, %s5, %s3
  // Predicated region
  $region2: #{tpu_custom_call.1} parent=0 // pred_check
    _
  $region3: #{tpu_custom_call.1} parent=0 // pred_check_branch
    %8 = sbr.rel (0) target = $region5
  $region4: #{tpu_custom_call.1} parent=0 // pred_region
    _
  $region5: #{tpu_custom_call.1} parent=0 // pred_fallthru
    _
  // Predicated region
  $region6: #{tpu_custom_call.1} parent=0 // pred_check
    _
  $region7: #{tpu_custom_call.1} parent=0 // pred_check_branch
    %10 = sbr.rel (0) target = $region9
  $region8: #{tpu_custom_call.1} parent=0 // pred_region
    _
  $region9: #{tpu_custom_call.1} parent=0 // pred_fallthru
    _
  %v11 = vld [vmem:[%s0] sm:$0xff]
  %v12 = vld [vmem:[%s1] sm:$0xff]
  %v13 = vlaneseq
  %v14 = vand.u32 %v13, 127
  %15 = vset.pattern.permute.xlu0 0
  %16 = vperm.xlu0 %15, %v12
  %v17 = vpop.permute.xlu0 %16
  %vm18 = vcmp.eq.s32.totalorder %v14, %v17
  %vm19 = vcmask 130048
  %v20 = vsel %vm19, %v11, -inf
  %21 = vmax.xlane.f32.xlu0 %v20
  %v22 = vpop.xlane.xlu0 %21
  %v23 = vsub.f32 %v11, %v22
  %v24 = vmul.f32 %v23, 1.442695
  %v25 = vpow.pop %v24
  %v26 = vsel %vm19, %v25, 0.0
  %27 = vadd.xlane.f32.xlu0 %v26
  %v28 = vpop.xlane.xlu0 %27
  %v29 = vlog2.pop %v28
  %v30 = vmul.f32 %v29, 0.6931472
  %v31 = vsel %vm18, %v23, 0.0
  %v32 = vsel %vm19, %v31, 0.0
  %33 = vadd.xlane.f32.xlu0 %v32
  %v34 = vpop.xlane.xlu0 %33
  %v35 = vsub.f32 %v34, %v30
  %v36 = vsel %vm19, %v23, 0.0
  %37 = vadd.xlane.f32.xlu0 %v36
  %v38 = vpop.xlane.xlu0 %37
  %v39 = vmul.f32 %v30, 16.0
  %v40 = vsub.f32 %v38, %v39
  %v41 = vmul.f32 %v40, 0.006666667
  %v42 = vmul.f32 %v35, 0.8933333
  %v43 = vadd.f32 %v41, %v42
  %v44 = vsub.f32 0.0, %v43
  %v45 = vmul.f32 %v35, 1.442695
  %v46 = vpow.pop %v45
  %v47 = vsub.f32 1.0, %v46
  %v48 = vmax.f32 %v47, 0.0
  %v49 = vmul.f32 %v48, %v48
  %v50 = vmul.f32 %v49, %v44
  %vm51 = vcmask 7168
  %52 = vst.msk [vmem:[%s2] sm:$0xff] %vm51, %v50
  // Predicated region
  $region10: #{tpu_custom_call.1} parent=0 // pred_check
    _
  $region11: #{tpu_custom_call.1} parent=0 // pred_check_branch
    %54 = sbr.rel (0) target = $region13
  $region12: #{tpu_custom_call.1} parent=0 // pred_region
    _
  $region13: #{tpu_custom_call.1} parent=0 // pred_fallthru
    _
  // Predicated region
  $region14: #{tpu_custom_call.1} parent=0 // pred_check
    _
  $region15: #{tpu_custom_call.1} parent=0 // pred_check_branch
    %56 = sbr.rel (0) target = $region17
  $region16: #{tpu_custom_call.1} parent=0 // pred_region
    _
  $region17: #{tpu_custom_call.1} parent=0 // pred_fallthru
    _

</llo_original>
